<compile_context>
chip_gen: v7x
topology: tpu7x:2x2x1
jax: 0.10.0
libtpu: 0.0.40
codegen_flags: <defaults>
</compile_context>

<pallas_src>
import functools

import jax
import jax.numpy as jnp
from jax.experimental import pallas as pl
from jax.experimental.pallas import tpu as pltpu

HIDDEN = 64
FUSED = 2 * HIDDEN  # 128: fused (actor|critic) hidden width == output slab width


def _round_up(x, m):
    return ((x + m - 1) // m) * m


# ----------------------------- kernel ---------------------------------------


def actor_critic_kernel(x_ref, w1_ref, w2_ref, w3_ref, b_ref, out_ref, *, action_dim):
    x = x_ref[...]
    b1 = b_ref[0:1, :]
    b2 = b_ref[1:2, :]
    b3 = b_ref[2:3, :]

    # layer 1: (TB, state_dim) @ (state_dim, 128)  -> fused actor|critic hidden
    h = jnp.dot(x, w1_ref[...], preferred_element_type=jnp.float32) + b1
    h = jnp.maximum(h, 0.0)
    h = h.astype(w2_ref.dtype)          # bf16 cast in bf16 mode; no-op in f32 mode

    # layer 2: block-diagonal (128, 128) keeps the two branches independent
    g = jnp.dot(h, w2_ref[...], preferred_element_type=jnp.float32) + b2
    g = jnp.maximum(g, 0.0)
    g = g.astype(w3_ref.dtype)

    # layer 3: (128, 128) -> lane-dense slab [actor pre-tanh | value | zero pad]
    y = jnp.dot(g, w3_ref[...], preferred_element_type=jnp.float32) + b3

    # tanh only on the actor lanes (value + pad lanes pass through untouched)
    lane = jax.lax.broadcasted_iota(jnp.int32, y.shape, 1)
    out_ref[...] = jnp.where(lane < action_dim, jnp.tanh(y), y).astype(out_ref.dtype)


# ----------------------------- packing ---------------------------------------


def pack_actor_critic(params, action_dim, hidden=HIDDEN, fused=FUSED):
    """Pack 12 per-branch arrays into 3 fused weight matrices + one (3, 128) bias block."""
    assert action_dim + 1 <= fused, (
        f"action_dim + 1 = {action_dim + 1} must fit in the {fused}-lane output slab")
    aw1, ab1, aw2, ab2, aw3, ab3, cw1, cb1, cw2, cb2, cw3, cb3 = params

    w1 = jnp.concatenate([aw1, cw1], axis=1)                       # (state_dim, 128)
    b1 = jnp.concatenate([ab1, cb1], axis=1)                       # (1, 128)

    w2 = jnp.zeros((fused, fused), jnp.float32)
    w2 = w2.at[:hidden, :hidden].set(aw2).at[hidden:, hidden:].set(cw2)   # block-diag
    b2 = jnp.concatenate([ab2, cb2], axis=1)                       # (1, 128)

    w3 = jnp.zeros((fused, fused), jnp.float32)
    w3 = w3.at[:hidden, :action_dim].set(aw3)                      # actor -> lanes 0:A
    w3 = w3.at[hidden:, action_dim:action_dim + 1].set(cw3)        # critic -> lane A
    b3 = jnp.zeros((1, fused), jnp.float32)
    b3 = b3.at[0, :action_dim].set(ab3[0]).at[0, action_dim].set(cb3[0, 0])

    bias = jnp.concatenate([b1, b2, b3], axis=0)                   # (3, 128), stays f32
    return [w1, w2, w3, bias]


# ----------------------------- wrapper ---------------------------------------


def actor_critic_forward(state, packed_params, action_dim,
                         tile_b=1024, compute_dtype=jnp.bfloat16,
                         out_dtype=jnp.float32, megacore_split=True,
                         return_slab=False):
    """state: (B, state_dim) f32.  Returns (action_mean (B, A), state_value (B, 1)),
    or the raw (B, 128) slab if return_slab=True (slice it inside the consumer's jit)."""
    B, state_dim = state.shape
    w1, w2, w3, bias = packed_params
    fused = w1.shape[1]
    assert action_dim + 1 <= fused, (
        f"action_dim + 1 = {action_dim + 1} must fit in the {fused}-lane output slab")

    # Batch tile: multiple of 8 sublanes, default 1024 (VMEM footprint << limits).
    # On v7x keep the grid at >= 2 steps when possible so both TensorCores get work.
    b8 = _round_up(max(B, 1), 8)
    tb = min(_round_up(tile_b, 8), b8)
    if megacore_split and b8 > 8:
        tb = min(tb, _round_up(pl.cdiv(b8, 2), 8))
    grid = (pl.cdiv(B, tb),)   # ragged last block: OOB reads dropped rows, writes masked

    # bf16 operand cast (v6e/v7x MXU-native); biases and accumulation stay f32.
    if compute_dtype != jnp.float32:
        state = state.astype(compute_dtype)
        w1, w2, w3 = (w.astype(compute_dtype) for w in (w1, w2, w3))

    kernel = functools.partial(actor_critic_kernel, action_dim=action_dim)

    out = pl.pallas_call(
        kernel,
        out_shape=jax.ShapeDtypeStruct((B, fused), out_dtype),
        grid=grid,
        in_specs=[
            pl.BlockSpec((tb, state_dim), lambda i: (i, 0)),      # state, streamed by batch
            pl.BlockSpec((state_dim, fused), lambda i: (0, 0)),   # weights resident
            pl.BlockSpec((fused, fused), lambda i: (0, 0)),
            pl.BlockSpec((fused, fused), lambda i: (0, 0)),
            pl.BlockSpec((3, fused), lambda i: (0, 0)),           # fused bias block (f32)
        ],
        out_specs=pl.BlockSpec((tb, fused), lambda i: (i, 0)),    # lane-dense slab
        compiler_params=pltpu.CompilerParams(
            dimension_semantics=("parallel",)),                   # megacore on v7x
    )(state, w1, w2, w3, bias)

    if return_slab:
        return out
    action_mean = out[:, :action_dim]
    state_value = out[:, action_dim:action_dim + 1]
    return action_mean, state_value


# --------------------------- init + reference --------------------------------


def init_linear(key, fan_in, fan_out):
    """PyTorch nn.Linear default init (uniform +-1/sqrt(fan_in)); W pre-transposed."""
    kw, kb = jax.random.split(key)
    bound = 1.0 / jnp.sqrt(jnp.float32(fan_in))
    w = jax.random.uniform(kw, (fan_in, fan_out), jnp.float32, -bound, bound)
    b = jax.random.uniform(kb, (1, fan_out), jnp.float32, -bound, bound)
    return w, b


def init_actor_critic(key, state_dim, action_dim, hidden=HIDDEN):
    keys = jax.random.split(key, 6)
    aw1, ab1 = init_linear(keys[0], state_dim, hidden)
    aw2, ab2 = init_linear(keys[1], hidden, hidden)
    aw3, ab3 = init_linear(keys[2], hidden, action_dim)
    cw1, cb1 = init_linear(keys[3], state_dim, hidden)
    cw2, cb2 = init_linear(keys[4], hidden, hidden)
    cw3, cb3 = init_linear(keys[5], hidden, 1)
    return [aw1, ab1, aw2, ab2, aw3, ab3, cw1, cb1, cw2, cb2, cw3, cb3]


def reference_forward(state, p):
    aw1, ab1, aw2, ab2, aw3, ab3, cw1, cb1, cw2, cb2, cw3, cb3 = p
    h = jnp.maximum(state @ aw1 + ab1, 0.0)
    h = jnp.maximum(h @ aw2 + ab2, 0.0)
    action_mean = jnp.tanh(h @ aw3 + ab3)
    g = jnp.maximum(state @ cw1 + cb1, 0.0)
    g = jnp.maximum(g @ cw2 + cb2, 0.0)
    state_value = g @ cw3 + cb3
    return action_mean, state_value


if __name__ == "__main__":
    key = jax.random.PRNGKey(0)
    k_params, k_state = jax.random.split(key)

    batch = 8
    state_dim = 16
    action_dim = 4

    params = init_actor_critic(k_params, state_dim, action_dim)
    packed = pack_actor_critic(params, action_dim)
    state = jax.random.normal(k_state, (batch, state_dim), jnp.float32)

    ref_action, ref_value = reference_forward(state, params)

    # 1) f32 compute path: matches the f32 reference tightly.
    action_mean, state_value = actor_critic_forward(
        state, packed, action_dim, compute_dtype=jnp.float32, out_dtype=jnp.float32)
    jax.block_until_ready((action_mean, state_value))
    assert action_mean.shape == (batch, action_dim)
    assert state_value.shape == (batch, 1)
    assert jnp.allclose(action_mean, ref_action, atol=1e-5, rtol=1e-5)
    assert jnp.allclose(state_value, ref_value, atol=1e-5, rtol=1e-5)

    # 2) default bf16-operand path (f32 accumulation) + bf16 output slab: looser tolerance.
    am_bf16, sv_bf16 = actor_critic_forward(
        state, packed, action_dim, out_dtype=jnp.bfloat16)
    jax.block_until_ready((am_bf16, sv_bf16))
    assert jnp.allclose(am_bf16.astype(jnp.float32), ref_action, atol=5e-2, rtol=5e-2)
    assert jnp.allclose(sv_bf16.astype(jnp.float32), ref_value, atol=5e-2, rtol=5e-2)

    print("KERNEL_OK")
</pallas_src>

<mosaic_0001>
module attributes {stable_mosaic.version = 11 : i64} {
  func.func @actor_critic_kernel(%arg0: i32, %arg1: memref<8x16xf32, #tpu.memory_space<vmem>>, %arg2: memref<16x128xf32, #tpu.memory_space<vmem>>, %arg3: memref<128x128xf32, #tpu.memory_space<vmem>>, %arg4: memref<128x128xf32, #tpu.memory_space<vmem>>, %arg5: memref<3x128xf32, #tpu.memory_space<vmem>>, %arg6: memref<8x128xf32, #tpu.memory_space<vmem>>) attributes {dimension_semantics = [#tpu.dimension_semantics<parallel>], iteration_bounds = array<i64: 1>, scalar_prefetch = 0 : i64, scratch_operands = 0 : i64, tpu.core_type = #tpu.core_type<tc>, window_params = [{transform_indices = @transform_0, window_bounds = array<i64: 8, 16>}, {pipeline_mode = #tpu.pipeline_mode<synchronous>, transform_indices = @transform_1, window_bounds = array<i64: 16, 128>}, {pipeline_mode = #tpu.pipeline_mode<synchronous>, transform_indices = @transform_2, window_bounds = array<i64: 128, 128>}, {pipeline_mode = #tpu.pipeline_mode<synchronous>, transform_indices = @transform_3, window_bounds = array<i64: 128, 128>}, {pipeline_mode = #tpu.pipeline_mode<synchronous>, transform_indices = @transform_4, window_bounds = array<i64: 3, 128>}, {transform_indices = @transform_5, window_bounds = array<i64: 8, 128>}]} {
    %c0 = arith.constant 0 : index
    %c0_0 = arith.constant 0 : index
    %0 = vector.load %arg1[%c0, %c0_0] : memref<8x16xf32, #tpu.memory_space<vmem>>, vector<8x16xf32>
    %c0_1 = arith.constant 0 : index
    %c0_2 = arith.constant 0 : index
    %1 = vector.load %arg5[%c0_1, %c0_2] : memref<3x128xf32, #tpu.memory_space<vmem>>, vector<1x128xf32>
    %c1 = arith.constant 1 : index
    %c0_3 = arith.constant 0 : index
    %2 = vector.load %arg5[%c1, %c0_3] : memref<3x128xf32, #tpu.memory_space<vmem>>, vector<1x128xf32>
    %c2 = arith.constant 2 : index
    %c0_4 = arith.constant 0 : index
    %3 = vector.load %arg5[%c2, %c0_4] : memref<3x128xf32, #tpu.memory_space<vmem>>, vector<1x128xf32>
    %c0_5 = arith.constant 0 : index
    %c0_6 = arith.constant 0 : index
    %4 = vector.load %arg2[%c0_5, %c0_6] : memref<16x128xf32, #tpu.memory_space<vmem>>, vector<16x128xf32>
    %cst = arith.constant dense<0.000000e+00> : vector<8x128xf32>
    %5 = tpu.matmul %0, %4, %cst {dimension_numbers = #tpu.dot_dimension_numbers<[1], [0], [0], [1], [0, 0, 1, 1], [], []>} : vector<8x16xf32>, vector<16x128xf32>, vector<8x128xf32> -> vector<8x128xf32>
    %6 = vector.broadcast %1 : vector<1x128xf32> to vector<8x128xf32>
    %7 = arith.addf %5, %6 : vector<8x128xf32>
    %cst_7 = arith.constant 0.000000e+00 : f32
    %8 = vector.broadcast %cst_7 : f32 to vector<8x128xf32>
    %9 = arith.maximumf %7, %8 : vector<8x128xf32>
    %c0_8 = arith.constant 0 : index
    %c0_9 = arith.constant 0 : index
    %10 = vector.load %arg3[%c0_8, %c0_9] : memref<128x128xf32, #tpu.memory_space<vmem>>, vector<128x128xf32>
    %cst_10 = arith.constant dense<0.000000e+00> : vector<8x128xf32>
    %11 = tpu.matmul %9, %10, %cst_10 {dimension_numbers = #tpu.dot_dimension_numbers<[1], [0], [0], [1], [0, 0, 1, 1], [], []>} : vector<8x128xf32>, vector<128x128xf32>, vector<8x128xf32> -> vector<8x128xf32>
    %12 = vector.broadcast %2 : vector<1x128xf32> to vector<8x128xf32>
    %13 = arith.addf %11, %12 : vector<8x128xf32>
    %cst_11 = arith.constant 0.000000e+00 : f32
    %14 = vector.broadcast %cst_11 : f32 to vector<8x128xf32>
    %15 = arith.maximumf %13, %14 : vector<8x128xf32>
    %c0_12 = arith.constant 0 : index
    %c0_13 = arith.constant 0 : index
    %16 = vector.load %arg4[%c0_12, %c0_13] : memref<128x128xf32, #tpu.memory_space<vmem>>, vector<128x128xf32>
    %cst_14 = arith.constant dense<0.000000e+00> : vector<8x128xf32>
    %17 = tpu.matmul %15, %16, %cst_14 {dimension_numbers = #tpu.dot_dimension_numbers<[1], [0], [0], [1], [0, 0, 1, 1], [], []>} : vector<8x128xf32>, vector<128x128xf32>, vector<8x128xf32> -> vector<8x128xf32>
    %18 = vector.broadcast %3 : vector<1x128xf32> to vector<8x128xf32>
    %19 = arith.addf %17, %18 : vector<8x128xf32>
    %20 = tpu.iota {dimensions = array<i32: 1>} : vector<8x128xi32>
    %c4_i32 = arith.constant 4 : i32
    %21 = vector.broadcast %c4_i32 : i32 to vector<8x128xi32>
    %22 = arith.cmpi slt, %20, %21 : vector<8x128xi32>
    %23 = math.tanh %19 : vector<8x128xf32>
    %24 = arith.select %22, %23, %19 : vector<8x128xi1>, vector<8x128xf32>
    %c0_15 = arith.constant 0 : index
    %c0_16 = arith.constant 0 : index
    %25 = vector.load %arg6[%c0_15, %c0_16] : memref<8x128xf32, #tpu.memory_space<vmem>>, vector<8x128xf32>
    tpu.vector_store %arg6[%c0_15, %c0_16], %24 {strides = array<i32>} : memref<8x128xf32, #tpu.memory_space<vmem>>, vector<8x128xf32>,
    return
  }
  func.func @transform_0(%arg0: i32) -> (i32, i32) {
    %c0_i32 = arith.constant 0 : i32
    %c0_i32_0 = arith.constant 0 : i32
    return %arg0, %c0_i32 : i32, i32
  }
  func.func @transform_1(%arg0: i32) -> (i32, i32) {
    %c0_i32 = arith.constant 0 : i32
    %c0_i32_0 = arith.constant 0 : i32
    %c0_i32_1 = arith.constant 0 : i32
    return %c0_i32, %c0_i32_0 : i32, i32
  }
  func.func @transform_2(%arg0: i32) -> (i32, i32) {
    %c0_i32 = arith.constant 0 : i32
    %c0_i32_0 = arith.constant 0 : i32
    %c0_i32_1 = arith.constant 0 : i32
    return %c0_i32, %c0_i32_0 : i32, i32
  }
  func.func @transform_3(%arg0: i32) -> (i32, i32) {
    %c0_i32 = arith.constant 0 : i32
    %c0_i32_0 = arith.constant 0 : i32
    %c0_i32_1 = arith.constant 0 : i32
    return %c0_i32, %c0_i32_0 : i32, i32
  }
  func.func @transform_4(%arg0: i32) -> (i32, i32) {
    %c0_i32 = arith.constant 0 : i32
    %c0_i32_0 = arith.constant 0 : i32
    %c0_i32_1 = arith.constant 0 : i32
    return %c0_i32, %c0_i32_0 : i32, i32
  }
  func.func @transform_5(%arg0: i32) -> (i32, i32) {
    %c0_i32 = arith.constant 0 : i32
    %c0_i32_0 = arith.constant 0 : i32
    return %arg0, %c0_i32 : i32, i32
  }
}

</mosaic_0001>

<llo_original>
// kernel: tpu_custom_call.1
$region0: #{tpu_custom_call.1}
  #allocation0 [shape = 'u32[]', space=smem, size = 0x4, offset = 0x4, fixed_abs, tag = 'smem constant byte address 0x4 - core index']
  #allocation1 [shape = 'u32[144,128]{1,0:T(1,128)}', space=vmem, size = 0x12000, scoped, tag = 'internal scratch']
  %s0 = inlined_call_operand.hbm [shape: f32[8,16], index: 0, kind: input, shape index: {}]
  %s1 = inlined_call_operand.hbm [shape: f32[16,128], index: 1, kind: input, shape index: {}]
  %s2 = inlined_call_operand.hbm [shape: f32[128,128], index: 2, kind: input, shape index: {}]
  %s3 = inlined_call_operand.hbm [shape: f32[128,128], index: 3, kind: input, shape index: {}]
  %s4 = inlined_call_operand.vmem [shape: f32[3,128], index: 4, kind: input, shape index: {}]
  %s5 = inlined_call_operand.hbm [shape: f32[8,128], index: 5, kind: output, shape index: {}]
  %s6 = sld [smem:[#allocation0]]
  $region46: #{tpu_custom_call.1} parent=0
    _
  %s8 = ssub.s32 1, %s6
  %s9 = scalar_select 0, %s8, %s6
  $region1: #{tpu_custom_call.1} parent=0
    #allocation2 [shape = 'u8[4096]{0}', space=vmem, size = 0x1000, scoped, tag = 'input window, operand 0, single buffered']
    #allocation3 [shape = 's32[1]{0}', space=sflag, size = 0x4, scoped, tag = 'scoped memory for tpu_custom_call.1']
    #allocation4 [shape = 's32[1]{0}', space=sflag, size = 0x4, scoped, tag = 'scoped memory for tpu_custom_call.1']
    #allocation5 [shape = 'u8[8192]{0}', space=vmem, size = 0x2000, scoped, tag = 'input window, operand 1, single buffered']
    #allocation6 [shape = 's32[1]{0}', space=sflag, size = 0x4, scoped, tag = 'scoped memory for tpu_custom_call.1']
    #allocation7 [shape = 'u8[65536]{0}', space=vmem, size = 0x10000, scoped, tag = 'input window, operand 2, single buffered']
    #allocation8 [shape = 'u8[65536]{0}', space=vmem, size = 0x10000, scoped, tag = 'input window, operand 3, single buffered']
    #allocation9 [shape = 's32[1]{0}', space=sflag, size = 0x4, scoped, tag = 'scoped memory for tpu_custom_call.1']
    #allocation10 [shape = 'u8[4096]{0}', space=vmem, size = 0x1000, scoped, tag = 'output window, operand 0, single buffered']
    %10 = vsyncpa [#allocation3], 0
    %11 = vsyncpa [#allocation6], 0
    %12 = vsyncpa [#allocation9], 0
    %13 = vsyncpa [#allocation4], 0
    // Predicated region
    $region2: #{tpu_custom_call.1} parent=1 // pred_check
      _
    $region3: #{tpu_custom_call.1} parent=1 // pred_check_branch
      %15 = sbr.rel (0) target = $region5
    $region4: #{tpu_custom_call.1} parent=1 // pred_region
      %s17 = ssub.s32 128, 128
      %18 = vsyncadd [#allocation3], %s17
      %s20 = sshll.u32 [#allocation2], 4
      %s21 = int_to_ptr.vmem [resolvable:$true] %s20
      %23 = dma.hbm_to_vmem [thread:$0]  %s0, 128, %s21, [#allocation3]
    $region5: #{tpu_custom_call.1} parent=1 // pred_fallthru
      _
    // Predicated region
    $region6: #{tpu_custom_call.1} parent=1 // pred_check
      _
    $region7: #{tpu_custom_call.1} parent=1 // pred_check_branch
      %25 = sbr.rel (0) target = $region9
    $region8: #{tpu_custom_call.1} parent=1 // pred_region
      %s27 = ssub.s32 256, 256
      %28 = vsyncadd [#allocation6], %s27
      %s29 = sshll.u32 [#allocation5], 4
      %s30 = int_to_ptr.vmem [resolvable:$true] %s29
      %35 = dma.hbm_to_vmem [thread:$0]  %s1, 256, %s30, [#allocation6], 128, 128, 8
    $region9: #{tpu_custom_call.1} parent=1 // pred_fallthru
      _
    // Predicated region
    $region10: #{tpu_custom_call.1} parent=1 // pred_check
      _
    $region11: #{tpu_custom_call.1} parent=1 // pred_check_branch
      %37 = sbr.rel (0) target = $region13
    $region12: #{tpu_custom_call.1} parent=1 // pred_region
      %s39 = ssub.s32 2048, 2048
      %40 = vsyncadd [#allocation6], %s39
      %s41 = sshll.u32 [#allocation7], 4
      %s42 = int_to_ptr.vmem [resolvable:$true] %s41
      %47 = dma.hbm_to_vmem [thread:$0]  %s2, 2048, %s42, [#allocation6], 128, 128, 8
    $region13: #{tpu_custom_call.1} parent=1 // pred_fallthru
      _
    // Predicated region
    $region14: #{tpu_custom_call.1} parent=1 // pred_check
      _
    $region15: #{tpu_custom_call.1} parent=1 // pred_check_branch
      %49 = sbr.rel (0) target = $region17
    $region16: #{tpu_custom_call.1} parent=1 // pred_region
      %s51 = ssub.s32 2048, 2048
      %52 = vsyncadd [#allocation9], %s51
      %s53 = sshll.u32 [#allocation8], 4
      %s54 = int_to_ptr.vmem [resolvable:$true] %s53
      %59 = dma.hbm_to_vmem [thread:$0]  %s3, 2048, %s54, [#allocation9], 128, 128, 8
    $region17: #{tpu_custom_call.1} parent=1 // pred_fallthru
      _
    // Predicated region
    $region18: #{tpu_custom_call.1} parent=1 // pred_check
      _
    $region19: #{tpu_custom_call.1} parent=1 // pred_check_branch
      %61 = sbr.rel (0) target = $region21
    $region20: #{tpu_custom_call.1} parent=1 // pred_region
      _
    $region21: #{tpu_custom_call.1} parent=1 // pred_fallthru
      _
    // Predicated region
    $region22: #{tpu_custom_call.1} parent=1 // pred_check
      _
    $region23: #{tpu_custom_call.1} parent=1 // pred_check_branch
      %63 = sbr.rel (0) target = $region25
    $region24: #{tpu_custom_call.1} parent=1 // pred_region
      %64 = dma.done [#allocation3], 128
    $region25: #{tpu_custom_call.1} parent=1 // pred_fallthru
      _
    // Predicated region
    $region26: #{tpu_custom_call.1} parent=1 // pred_check
      _
    $region27: #{tpu_custom_call.1} parent=1 // pred_check_branch
      %66 = sbr.rel (0) target = $region29
    $region28: #{tpu_custom_call.1} parent=1 // pred_region
      %67 = dma.done [#allocation6], 256
    $region29: #{tpu_custom_call.1} parent=1 // pred_fallthru
      _
    // Predicated region
    $region30: #{tpu_custom_call.1} parent=1 // pred_check
      _
    $region31: #{tpu_custom_call.1} parent=1 // pred_check_branch
      %69 = sbr.rel (0) target = $region33
    $region32: #{tpu_custom_call.1} parent=1 // pred_region
      %70 = dma.done [#allocation6], 2048
    $region33: #{tpu_custom_call.1} parent=1 // pred_fallthru
      _
    // Predicated region
    $region34: #{tpu_custom_call.1} parent=1 // pred_check
      _
    $region35: #{tpu_custom_call.1} parent=1 // pred_check_branch
      %72 = sbr.rel (0) target = $region37
    $region36: #{tpu_custom_call.1} parent=1 // pred_region
      %73 = dma.done [#allocation9], 2048
    $region37: #{tpu_custom_call.1} parent=1 // pred_fallthru
      _
    %v74 = vld [vmem:[#allocation2] sm:$0xff]
    %v75 = vld [vmem:[%s4] sm:$0x1]
    %v76 = vld [vmem:[%s4 + $0x1] sm:$0x1]
    %v77 = vld [vmem:[%s4 + $0x2] sm:$0x1]
    %v78 = vld [vmem:[#allocation5] sm:$0xff]
    %v79 = vld [vmem:[#allocation5 + $0x8] sm:$0xff]
    %v80 = vlaneseq
    %v81 = vshrl.u32 %v80, 7
    %v82 = vsub.s32 0, %v81
    %v83 = vrot.slane %v75, %v82
    %vm84 = vcmask 130048
    %v86 = vsel %vm84, %v74, 0
    %88 = vmatprep.subr.mxu0 0.0
    %89 = vmatpush1.msra.mxu0 %v78
    %90 = vmatprep.subr.mxu0 0.0
    %91 = vmatpush1.msra.mxu0 %v79
    %92 = vmatprep.subr.mxu0 0.0
    %93 = vmatpush1.msra.mxu0 0.0
    %94 = vmatprep.subr.mxu0 0.0
    %95 = vmatpush1.msra.mxu0 0.0
    %96 = vmatprep.subr.mxu0 0.0
    %97 = vmatpush1.msra.mxu0 0.0
    %98 = vmatprep.subr.mxu0 0.0
    %99 = vmatpush1.msra.mxu0 0.0
    %100 = vmatprep.subr.mxu0 0.0
    %101 = vmatpush1.msra.mxu0 0.0
    %102 = vmatprep.subr.mxu0 0.0
    %103 = vmatpush1.msra.mxu0 0.0
    %104 = vmatprep.subr.mxu0 0.0
    %105 = vmatpush1.msra.mxu0 0.0
    %106 = vmatprep.subr.mxu0 0.0
    %107 = vmatpush1.msra.mxu0 0.0
    %108 = vmatprep.subr.mxu0 0.0
    %109 = vmatpush1.msra.mxu0 0.0
    %110 = vmatprep.subr.mxu0 0.0
    %111 = vmatpush1.msra.mxu0 0.0
    %112 = vmatprep.subr.mxu0 0.0
    %113 = vmatpush1.msra.mxu0 0.0
    %114 = vmatprep.subr.mxu0 0.0
    %115 = vmatpush1.msra.mxu0 0.0
    %116 = vmatprep.subr.mxu0 0.0
    %117 = vmatpush1.msra.mxu0 0.0
    %118 = vmatprep.subr.mxu0 0.0
    %119 = vmatpush1.msra.mxu0 0.0
    %120 = vmatprep.subr.mxu0 0.0
    %121 = vmatpush1.msra.mxu0 0.0
    %122 = vmatprep.subr.mxu0 0.0
    %123 = vmatpush1.msra.mxu0 0.0
    %124 = vmatprep.subr.mxu0 0.0
    %125 = vmatpush1.msra.mxu0 0.0
    %126 = vmatprep.subr.mxu0 0.0
    %127 = vmatpush1.msra.mxu0 0.0
    %128 = vmatprep.subr.mxu0 0.0
    %129 = vmatpush1.msra.mxu0 0.0
    %130 = vmatprep.subr.mxu0 0.0
    %131 = vmatpush1.msra.mxu0 0.0
    %132 = vmatprep.subr.mxu0 0.0
    %133 = vmatpush1.msra.mxu0 0.0
    %134 = vmatprep.subr.mxu0 0.0
    %135 = vmatpush1.msra.mxu0 0.0
    %136 = vmatprep.subr.mxu0 0.0
    %137 = vmatpush1.msra.mxu0 0.0
    %138 = vmatprep.subr.mxu0 0.0
    %139 = vmatpush1.msra.mxu0 0.0
    %140 = vmatprep.subr.mxu0 0.0
    %141 = vmatpush1.msra.mxu0 0.0
    %142 = vmatprep.subr.mxu0 0.0
    %143 = vmatpush1.msra.mxu0 0.0
    %144 = vmatprep.subr.mxu0 0.0
    %145 = vmatpush1.msra.mxu0 0.0
    %146 = vmatprep.subr.mxu0 0.0
    %147 = vmatpush1.msra.mxu0 0.0
    %148 = vmatprep.subr.mxu0 0.0
    %149 = vmatpush1.msra.mxu0 0.0
    %150 = vmatprep.subr.mxu0 0.0
    %151 = vmatpush1.msra.mxu0 0.0
    %152 = vmatprep.mubr.f32.mxu0 0.0
    %153 = vmatmul.mubr.f32.gmra.mrb[0].mxu0 %v86
    %v154 = vpop.f32.mrb[0].mxu0
    %v155 = vadd.f32 %v83, %v154
    %v156 = vpop.f32.mrb[0].mxu0
    %157 = vdwg.mxu0
    %v158 = vmax.f32 %v155, 0.0
    %v159 = vld [vmem:[#allocation7] sm:$0xff]
    %v160 = vld [vmem:[#allocation7 + $0x8] sm:$0xff]
    %v161 = vld [vmem:[#allocation7 + $0x10] sm:$0xff]
    %v162 = vld [vmem:[#allocation7 + $0x18] sm:$0xff]
    %v163 = vld [vmem:[#allocation7 + $0x20] sm:$0xff]
    %v164 = vld [vmem:[#allocation7 + $0x28] sm:$0xff]
    %v165 = vld [vmem:[#allocation7 + $0x30] sm:$0xff]
    %v166 = vld [vmem:[#allocation7 + $0x38] sm:$0xff]
    %v167 = vld [vmem:[#allocation7 + $0x40] sm:$0xff]
    %v168 = vld [vmem:[#allocation7 + $0x48] sm:$0xff]
    %v169 = vld [vmem:[#allocation7 + $0x50] sm:$0xff]
    %v170 = vld [vmem:[#allocation7 + $0x58] sm:$0xff]
    %v171 = vld [vmem:[#allocation7 + $0x60] sm:$0xff]
    %v172 = vld [vmem:[#allocation7 + $0x68] sm:$0xff]
    %v173 = vld [vmem:[#allocation7 + $0x70] sm:$0xff]
    %v174 = vld [vmem:[#allocation7 + $0x78] sm:$0xff]
    %v175 = vlaneseq
    %v176 = vshrl.u32 %v175, 7
    %v177 = vsub.s32 0, %v176
    %v178 = vrot.slane %v76, %v177
    %179 = vmatprep.subr.mxu0 0.0
    %180 = vmatpush1.msra.mxu0 %v159
    %181 = vmatprep.subr.mxu0 0.0
    %182 = vmatpush1.msra.mxu0 %v160
    %183 = vmatprep.subr.mxu0 0.0
    %184 = vmatpush1.msra.mxu0 %v161
    %185 = vmatprep.subr.mxu0 0.0
    %186 = vmatpush1.msra.mxu0 %v162
    %187 = vmatprep.subr.mxu0 0.0
    %188 = vmatpush1.msra.mxu0 %v163
    %189 = vmatprep.subr.mxu0 0.0
    %190 = vmatpush1.msra.mxu0 %v164
    %191 = vmatprep.subr.mxu0 0.0
    %192 = vmatpush1.msra.mxu0 %v165
    %193 = vmatprep.subr.mxu0 0.0
    %194 = vmatpush1.msra.mxu0 %v166
    %195 = vmatprep.subr.mxu0 0.0
    %196 = vmatpush1.msra.mxu0 %v167
    %197 = vmatprep.subr.mxu0 0.0
    %198 = vmatpush1.msra.mxu0 %v168
    %199 = vmatprep.subr.mxu0 0.0
    %200 = vmatpush1.msra.mxu0 %v169
    %201 = vmatprep.subr.mxu0 0.0
    %202 = vmatpush1.msra.mxu0 %v170
    %203 = vmatprep.subr.mxu0 0.0
    %204 = vmatpush1.msra.mxu0 %v171
    %205 = vmatprep.subr.mxu0 0.0
    %206 = vmatpush1.msra.mxu0 %v172
    %207 = vmatprep.subr.mxu0 0.0
    %208 = vmatpush1.msra.mxu0 %v173
    %209 = vmatprep.subr.mxu0 0.0
    %210 = vmatpush1.msra.mxu0 %v174
    %211 = vmatprep.subr.mxu0 0.0
    %212 = vmatpush1.msra.mxu0 0.0
    %213 = vmatprep.subr.mxu0 0.0
    %214 = vmatpush1.msra.mxu0 0.0
    %215 = vmatprep.subr.mxu0 0.0
    %216 = vmatpush1.msra.mxu0 0.0
    %217 = vmatprep.subr.mxu0 0.0
    %218 = vmatpush1.msra.mxu0 0.0
    %219 = vmatprep.subr.mxu0 0.0
    %220 = vmatpush1.msra.mxu0 0.0
    %221 = vmatprep.subr.mxu0 0.0
    %222 = vmatpush1.msra.mxu0 0.0
    %223 = vmatprep.subr.mxu0 0.0
    %224 = vmatpush1.msra.mxu0 0.0
    %225 = vmatprep.subr.mxu0 0.0
    %226 = vmatpush1.msra.mxu0 0.0
    %227 = vmatprep.subr.mxu0 0.0
    %228 = vmatpush1.msra.mxu0 0.0
    %229 = vmatprep.subr.mxu0 0.0
    %230 = vmatpush1.msra.mxu0 0.0
    %231 = vmatprep.subr.mxu0 0.0
    %232 = vmatpush1.msra.mxu0 0.0
    %233 = vmatprep.subr.mxu0 0.0
    %234 = vmatpush1.msra.mxu0 0.0
    %235 = vmatprep.subr.mxu0 0.0
    %236 = vmatpush1.msra.mxu0 0.0
    %237 = vmatprep.subr.mxu0 0.0
    %238 = vmatpush1.msra.mxu0 0.0
    %239 = vmatprep.subr.mxu0 0.0
    %240 = vmatpush1.msra.mxu0 0.0
    %241 = vmatprep.subr.mxu0 0.0
    %242 = vmatpush1.msra.mxu0 0.0
    %243 = vmatprep.mubr.f32.mxu0 0.0
    %244 = vmatmul.mubr.f32.gmra.mrb[0].mxu0 %v158
    %v245 = vpop.f32.mrb[0].mxu0
    %v246 = vadd.f32 %v178, %v245
    %v247 = vpop.f32.mrb[0].mxu0
    %248 = vdwg.mxu0
    %v249 = vmax.f32 %v246, 0.0
    %v250 = vld [vmem:[#allocation8] sm:$0xff]
    %v251 = vld [vmem:[#allocation8 + $0x8] sm:$0xff]
    %v252 = vld [vmem:[#allocation8 + $0x10] sm:$0xff]
    %v253 = vld [vmem:[#allocation8 + $0x18] sm:$0xff]
    %v254 = vld [vmem:[#allocation8 + $0x20] sm:$0xff]
    %v255 = vld [vmem:[#allocation8 + $0x28] sm:$0xff]
    %v256 = vld [vmem:[#allocation8 + $0x30] sm:$0xff]
    %v257 = vld [vmem:[#allocation8 + $0x38] sm:$0xff]
    %v258 = vld [vmem:[#allocation8 + $0x40] sm:$0xff]
    %v259 = vld [vmem:[#allocation8 + $0x48] sm:$0xff]
    %v260 = vld [vmem:[#allocation8 + $0x50] sm:$0xff]
    %v261 = vld [vmem:[#allocation8 + $0x58] sm:$0xff]
    %v262 = vld [vmem:[#allocation8 + $0x60] sm:$0xff]
    %v263 = vld [vmem:[#allocation8 + $0x68] sm:$0xff]
    %v264 = vld [vmem:[#allocation8 + $0x70] sm:$0xff]
    %v265 = vld [vmem:[#allocation8 + $0x78] sm:$0xff]
    %v266 = vlaneseq
    %v267 = vshrl.u32 %v266, 7
    %v268 = vsub.s32 0, %v267
    %v269 = vrot.slane %v77, %v268
    %270 = vmatprep.subr.mxu0 0.0
    %271 = vmatpush1.msra.mxu0 %v250
    %272 = vmatprep.subr.mxu0 0.0
    %273 = vmatpush1.msra.mxu0 %v251
    %274 = vmatprep.subr.mxu0 0.0
    %275 = vmatpush1.msra.mxu0 %v252
    %276 = vmatprep.subr.mxu0 0.0
    %277 = vmatpush1.msra.mxu0 %v253
    %278 = vmatprep.subr.mxu0 0.0
    %279 = vmatpush1.msra.mxu0 %v254
    %280 = vmatprep.subr.mxu0 0.0
    %281 = vmatpush1.msra.mxu0 %v255
    %282 = vmatprep.subr.mxu0 0.0
    %283 = vmatpush1.msra.mxu0 %v256
    %284 = vmatprep.subr.mxu0 0.0
    %285 = vmatpush1.msra.mxu0 %v257
    %286 = vmatprep.subr.mxu0 0.0
    %287 = vmatpush1.msra.mxu0 %v258
    %288 = vmatprep.subr.mxu0 0.0
    %289 = vmatpush1.msra.mxu0 %v259
    %290 = vmatprep.subr.mxu0 0.0
    %291 = vmatpush1.msra.mxu0 %v260
    %292 = vmatprep.subr.mxu0 0.0
    %293 = vmatpush1.msra.mxu0 %v261
    %294 = vmatprep.subr.mxu0 0.0
    %295 = vmatpush1.msra.mxu0 %v262
    %296 = vmatprep.subr.mxu0 0.0
    %297 = vmatpush1.msra.mxu0 %v263
    %298 = vmatprep.subr.mxu0 0.0
    %299 = vmatpush1.msra.mxu0 %v264
    %300 = vmatprep.subr.mxu0 0.0
    %301 = vmatpush1.msra.mxu0 %v265
    %302 = vmatprep.subr.mxu0 0.0
    %303 = vmatpush1.msra.mxu0 0.0
    %304 = vmatprep.subr.mxu0 0.0
    %305 = vmatpush1.msra.mxu0 0.0
    %306 = vmatprep.subr.mxu0 0.0
    %307 = vmatpush1.msra.mxu0 0.0
    %308 = vmatprep.subr.mxu0 0.0
    %309 = vmatpush1.msra.mxu0 0.0
    %310 = vmatprep.subr.mxu0 0.0
    %311 = vmatpush1.msra.mxu0 0.0
    %312 = vmatprep.subr.mxu0 0.0
    %313 = vmatpush1.msra.mxu0 0.0
    %314 = vmatprep.subr.mxu0 0.0
    %315 = vmatpush1.msra.mxu0 0.0
    %316 = vmatprep.subr.mxu0 0.0
    %317 = vmatpush1.msra.mxu0 0.0
    %318 = vmatprep.subr.mxu0 0.0
    %319 = vmatpush1.msra.mxu0 0.0
    %320 = vmatprep.subr.mxu0 0.0
    %321 = vmatpush1.msra.mxu0 0.0
    %322 = vmatprep.subr.mxu0 0.0
    %323 = vmatpush1.msra.mxu0 0.0
    %324 = vmatprep.subr.mxu0 0.0
    %325 = vmatpush1.msra.mxu0 0.0
    %326 = vmatprep.subr.mxu0 0.0
    %327 = vmatpush1.msra.mxu0 0.0
    %328 = vmatprep.subr.mxu0 0.0
    %329 = vmatpush1.msra.mxu0 0.0
    %330 = vmatprep.subr.mxu0 0.0
    %331 = vmatpush1.msra.mxu0 0.0
    %332 = vmatprep.subr.mxu0 0.0
    %333 = vmatpush1.msra.mxu0 0.0
    %334 = vmatprep.mubr.f32.mxu0 0.0
    %335 = vmatmul.mubr.f32.gmra.mrb[0].mxu0 %v249
    %v336 = vpop.f32.mrb[0].mxu0
    %v337 = vadd.f32 %v269, %v336
    %v338 = vpop.f32.mrb[0].mxu0
    %339 = vdwg.mxu0
    %v340 = vlaneseq
    %v341 = vand.u32 %v340, 127
    %vm342 = vcmp.lt.s32.totalorder %v341, 4
    %v343 = vtanh.pop %v337
    %v344 = vsel %vm342, %v343, %v337
    %345 = vst [vmem:[#allocation10] sm:$0xff] %v344
    // Predicated region
    $region38: #{tpu_custom_call.1} parent=1 // pred_check
      _
    $region39: #{tpu_custom_call.1} parent=1 // pred_check_branch
      %347 = sbr.rel (0) target = $region41
    $region40: #{tpu_custom_call.1} parent=1 // pred_region
      %s349 = ssub.s32 128, 128
      %350 = vsyncadd [#allocation4], %s349
      %s352 = sshll.u32 [#allocation10], 4
      %s353 = int_to_ptr.vmem [resolvable:$true] %s352
      %355 = dma.vmem_to_hbm [thread:$0]  %s353, 128, %s5, [#allocation4]
    $region41: #{tpu_custom_call.1} parent=1 // pred_fallthru
      _
    // Predicated region
    $region42: #{tpu_custom_call.1} parent=1 // pred_check
      _
    $region43: #{tpu_custom_call.1} parent=1 // pred_check_branch
      %357 = sbr.rel (0) target = $region45
    $region44: #{tpu_custom_call.1} parent=1 // pred_region
      %358 = dma.done [#allocation4], 128
    $region45: #{tpu_custom_call.1} parent=1 // pred_fallthru
      _
    %359 = vsyncpa [#allocation3], 1
    %360 = vsyncpa [#allocation6], 1
    %361 = vsyncpa [#allocation9], 1
    %362 = vsyncpa [#allocation4], 1

</llo_original>
